<compile_context>
chip_gen: v7x
topology: tpu7x:2x2x1
jax: 0.10.0
libtpu: 0.0.40
codegen_flags: <defaults>
</compile_context>

<pallas_src>
import jax
import jax.numpy as jnp
from jax.experimental import pallas as pl
from jax.experimental.pallas import tpu as pltpu


_VMEM_BUDGET = 36 * 1024 * 1024   # inputs (double-buffered) + accumulators
_VMEM_LIMIT = 48 * 1024 * 1024    # scoped VMEM limit; safe on v7x's 64 MiB


def _pick_tile_h(n, c, h, w, in_bytes):
    """Rows of H per block so resident VMEM stays under _VMEM_BUDGET."""
    w_pad = ((w + 127) // 128) * 128                        # lane padding
    per_row = 2 * 2 * n * c * w_pad * in_bytes + 4 * n * w_pad * 4
    t = _VMEM_BUDGET // max(per_row, 1)
    if t >= h or h <= 8:
        return h                                            # single full-extent block
    # TODO(synk): for pathological N*C*W where even 8 rows exceed the budget,
    # a lane-tiled (masked W) variant would be needed; not generated here.
    return max(8, (t // 8) * 8)                             # sublane-aligned tile


def _tile_sum(a):
    """(N, TH, W) -> (N, 1, 1) via sequential single-axis reductions."""
    return jnp.sum(jnp.sum(a, axis=2, keepdims=True), axis=1, keepdims=True)


def _make_kernel(n, c, h, w, tile_h, tiles_per_core, needs_mask):
    def kernel(x_ref, t_ref, ce_out, inter_out, ssum_out, tsum_out,
               ce_acc, inter_acc, ssum_acc, tsum_acc):
        k = pl.program_id(1)

        @pl.when(k == 0)
        def _init():
            ce_acc[...] = jnp.zeros_like(ce_acc)
            inter_acc[...] = jnp.zeros_like(inter_acc)
            ssum_acc[...] = jnp.zeros_like(ssum_acc)
            tsum_acc[...] = jnp.zeros_like(tsum_acc)

        # Native-dtype DMA (bf16 models halve HBM traffic); promote in-register.
        x = x_ref[...].astype(jnp.float32)     # (N, C, TH, W)
        t = t_ref[...].astype(jnp.float32)     # (N, C, TH, W)

        # ---- cross_entropy with probability targets (class axis = 1) --------
        # per-position CE = sum_c t*(lse - x) = lse*sum_c(t) - sum_c(t*x)
        m = jnp.max(x, axis=1, keepdims=True)            # (N, 1, TH, W)
        e = jnp.exp(x - m)                               # (N, C, TH, W)
        lse = m[:, 0] + jnp.log(jnp.sum(e, axis=1))      # (N, TH, W)
        t_c = jnp.sum(t, axis=1)                         # (N, TH, W)
        tx_c = jnp.sum(t * x, axis=1)                    # (N, TH, W)
        ce_p = lse * t_c - tx_c                          # (N, TH, W)

        # ---- soft-Dice partials on sigmoid(input) ----------------------------
        # sigmoid(x) = exp(x)/(1+exp(x)) = e / (e + exp(-m)); reuses the softmax
        # exponent, exp(-m) is only per-position (amortized over C).
        s = e / (e + jnp.exp(-m))                        # (N, C, TH, W)
        inter_p = jnp.sum(s * t, axis=1)                 # (N, TH, W)
        ssum_p = jnp.sum(s, axis=1)                      # (N, TH, W)
        tsum_p = t_c

        if needs_mask:
            # Rows past H (ragged last tile / phantom tile of an odd 2-core
            # split) contribute nothing. Select-based masking also neutralizes
            # any NaN/inf computed from the unspecified padded rows.
            row0 = (pl.program_id(0) * tiles_per_core + k) * tile_h
            rows_left = h - row0
            iota = jax.lax.broadcasted_iota(jnp.int32, (tile_h, w), 0)
            msk = iota < rows_left                       # (TH, W); broadcasts over N
            zero = jnp.float32(0.0)
            ce_p = jnp.where(msk, ce_p, zero)
            inter_p = jnp.where(msk, inter_p, zero)
            ssum_p = jnp.where(msk, ssum_p, zero)
            tsum_p = jnp.where(msk, tsum_p, zero)

        ce_acc[...] += ce_p
        inter_acc[...] += inter_p
        ssum_acc[...] += ssum_p
        tsum_acc[...] += tsum_p

        @pl.when(k == pl.num_programs(1) - 1)
        def _finalize():
            # Single cross-lane (XLU) reduction pass per core.
            ce_out[0] = _tile_sum(ce_acc[...])
            inter_out[0] = _tile_sum(inter_acc[...])
            ssum_out[0] = _tile_sum(ssum_acc[...])
            tsum_out[0] = _tile_sum(tsum_acc[...])

    return kernel


def bce_dice_loss(inp, tgt, tile_h=None, num_core_splits=2):
    """inp, tgt: (N, C, H, W) float arrays (class-probability targets).
    Returns the scalar f32 softmax-CE + soft-Dice loss."""
    n, c, h, w = inp.shape
    assert tgt.shape == inp.shape

    if tile_h is None:
        tile_h = _pick_tile_h(n, c, h, w, inp.dtype.itemsize)
    tile_h = min(tile_h, h)
    assert tile_h == h or tile_h % 8 == 0, "tile_h must be sublane-aligned or full-extent"

    n_h_tiles = pl.cdiv(h, tile_h)
    num_splits = num_core_splits if n_h_tiles >= num_core_splits else 1
    tiles_per_core = pl.cdiv(n_h_tiles, num_splits)
    needs_mask = (num_splits * tiles_per_core * tile_h) != h

    def in_map(ci, k):
        # Clamp so the phantom tile of an odd split re-reads (and fully masks)
        # the last real block instead of walking off the array.
        return (0, 0, jnp.minimum(ci * tiles_per_core + k, n_h_tiles - 1), 0)

    def out_map(ci, k):
        return (ci, 0, 0, 0)

    part_shape = jax.ShapeDtypeStruct((num_splits, n, 1, 1), jnp.float32)
    part_spec = pl.BlockSpec((1, n, 1, 1), out_map)

    kernel = _make_kernel(n, c, h, w, tile_h, tiles_per_core, needs_mask)

    ce_p, inter_p, ssum_p, tsum_p = pl.pallas_call(
        kernel,
        out_shape=(part_shape, part_shape, part_shape, part_shape),
        grid_spec=pltpu.PrefetchScalarGridSpec(
            num_scalar_prefetch=0,
            grid=(num_splits, tiles_per_core),
            in_specs=[
                pl.BlockSpec((n, c, tile_h, w), in_map),
                pl.BlockSpec((n, c, tile_h, w), in_map),
            ],
            out_specs=[part_spec, part_spec, part_spec, part_spec],
            scratch_shapes=[
                pltpu.VMEM((n, tile_h, w), jnp.float32),  # CE partials
                pltpu.VMEM((n, tile_h, w), jnp.float32),  # intersection partials
                pltpu.VMEM((n, tile_h, w), jnp.float32),  # sigmoid-sum partials
                pltpu.VMEM((n, tile_h, w), jnp.float32),  # target-sum partials
            ],
        ),
        compiler_params=pltpu.CompilerParams(
            dimension_semantics=("parallel", "arbitrary"),
            vmem_limit_bytes=_VMEM_LIMIT,
        ),
    )(inp, tgt)

    # Tiny finalization in plain JAX: sum the per-core partials, then the
    # dice division / means (scalar work, not worth a kernel epilogue sync).
    ce_sum = jnp.sum(ce_p)
    inter = jnp.sum(inter_p, axis=(0, 2, 3))   # (N,)
    ssum = jnp.sum(ssum_p, axis=(0, 2, 3))     # (N,)
    tsum = jnp.sum(tsum_p, axis=(0, 2, 3))     # (N,)

    smooth = jnp.float32(1e-5)
    bce = ce_sum / jnp.float32(n * h * w)
    dice = (2.0 * inter + smooth) / (ssum + tsum + smooth)
    return bce + (1.0 - jnp.sum(dice) / jnp.float32(n))


def _bce_dice_loss_ref(inp, tgt):
    # Pure-JAX reference mirroring the PyTorch module.
    n = inp.shape[0]
    logp = jax.nn.log_softmax(inp.astype(jnp.float32), axis=1)
    bce = jnp.mean(-jnp.sum(tgt * logp, axis=1))
    smooth = 1e-5
    s = jax.nn.sigmoid(inp.astype(jnp.float32)).reshape(n, -1)
    t = tgt.astype(jnp.float32).reshape(n, -1)
    inter = jnp.sum(s * t, axis=1)
    dice = (2.0 * inter + smooth) / (jnp.sum(s, axis=1) + jnp.sum(t, axis=1) + smooth)
    return bce + (1.0 - jnp.sum(dice) / n)


if __name__ == "__main__":
    key = jax.random.PRNGKey(0)
    k1, k2, k3, k4 = jax.random.split(key, 4)

    # Case 1: (2, 4, 16, 16) -- auto tile (single block, single grid step).
    N, C, H, W = 2, 4, 16, 16
    x = jax.random.normal(k1, (N, C, H, W), dtype=jnp.float32)
    # Targets as per-pixel class probabilities (same shape as input).
    t = jax.nn.softmax(jax.random.normal(k2, (N, C, H, W), dtype=jnp.float32), axis=1)
    ref = jax.block_until_ready(_bce_dice_loss_ref(x, t))

    out = jax.block_until_ready(bce_dice_loss(x, t))
    assert jnp.allclose(out, ref, rtol=1e-4, atol=1e-5), (out, ref)

    # Forced small tile: exercises the 2-way core split + init/accumulate/finalize.
    out2 = jax.block_until_ready(bce_dice_loss(x, t, tile_h=8))
    assert jnp.allclose(out2, ref, rtol=1e-4, atol=1e-5), (out2, ref)

    # Case 2: ragged H (20 rows, tile_h=8) -> masked last tile + phantom tile.
    N2, C2, H2, W2 = 2, 3, 20, 16
    x2 = jax.random.normal(k3, (N2, C2, H2, W2), dtype=jnp.float32)
    t2 = jax.nn.softmax(jax.random.normal(k4, (N2, C2, H2, W2), dtype=jnp.float32), axis=1)
    ref2 = jax.block_until_ready(_bce_dice_loss_ref(x2, t2))
    out3 = jax.block_until_ready(bce_dice_loss(x2, t2, tile_h=8))
    assert jnp.allclose(out3, ref2, rtol=1e-4, atol=1e-5), (out3, ref2)

    print("KERNEL_OK")
</pallas_src>

<mosaic_0001>
module attributes {stable_mosaic.version = 11 : i64} {
  func.func @kernel(%arg0: i32, %arg1: i32, %arg2: memref<2x4x16x16xf32, #tpu.memory_space<vmem>>, %arg3: memref<2x4x16x16xf32, #tpu.memory_space<vmem>>, %arg4: memref<1x2x1x1xf32, #tpu.memory_space<vmem>>, %arg5: memref<1x2x1x1xf32, #tpu.memory_space<vmem>>, %arg6: memref<1x2x1x1xf32, #tpu.memory_space<vmem>>, %arg7: memref<1x2x1x1xf32, #tpu.memory_space<vmem>>, %arg8: memref<2x16x16xf32, #tpu.memory_space<vmem>>, %arg9: memref<2x16x16xf32, #tpu.memory_space<vmem>>, %arg10: memref<2x16x16xf32, #tpu.memory_space<vmem>>, %arg11: memref<2x16x16xf32, #tpu.memory_space<vmem>>) attributes {dimension_semantics = [#tpu.dimension_semantics<parallel>, #tpu.dimension_semantics<arbitrary>], iteration_bounds = array<i64: 1, 1>, scalar_prefetch = 0 : i64, scratch_operands = 4 : i64, tpu.core_type = #tpu.core_type<tc>, window_params = [{transform_indices = @transform_0, window_bounds = array<i64: 2, 4, 16, 16>}, {transform_indices = @transform_1, window_bounds = array<i64: 2, 4, 16, 16>}, {transform_indices = @transform_2, window_bounds = array<i64: 1, 2, 1, 1>}, {transform_indices = @transform_3, window_bounds = array<i64: 1, 2, 1, 1>}, {transform_indices = @transform_4, window_bounds = array<i64: 1, 2, 1, 1>}, {transform_indices = @transform_5, window_bounds = array<i64: 1, 2, 1, 1>}]} {
    %c0_i32 = arith.constant 0 : i32
    %0 = arith.cmpi eq, %arg1, %c0_i32 : i32
    %1 = arith.extui %0 : i1 to i32
    %c0_i32_0 = arith.constant 0 : i32
    %2 = arith.cmpi ne, %1, %c0_i32_0 : i32
    scf.if %2 {
      %cst_40 = arith.constant 0.000000e+00 : f32
      %43 = vector.broadcast %cst_40 : f32 to vector<2x16x16xf32>
      %c0_41 = arith.constant 0 : index
      %c0_42 = arith.constant 0 : index
      %c0_43 = arith.constant 0 : index
      %44 = vector.load %arg8[%c0_41, %c0_42, %c0_43] : memref<2x16x16xf32, #tpu.memory_space<vmem>>, vector<2x16x16xf32>
      tpu.vector_store %arg8[%c0_41, %c0_42, %c0_43], %43 {strides = array<i32>} : memref<2x16x16xf32, #tpu.memory_space<vmem>>, vector<2x16x16xf32>,
      %cst_44 = arith.constant 0.000000e+00 : f32
      %45 = vector.broadcast %cst_44 : f32 to vector<2x16x16xf32>
      %c0_45 = arith.constant 0 : index
      %c0_46 = arith.constant 0 : index
      %c0_47 = arith.constant 0 : index
      %46 = vector.load %arg9[%c0_45, %c0_46, %c0_47] : memref<2x16x16xf32, #tpu.memory_space<vmem>>, vector<2x16x16xf32>
      tpu.vector_store %arg9[%c0_45, %c0_46, %c0_47], %45 {strides = array<i32>} : memref<2x16x16xf32, #tpu.memory_space<vmem>>, vector<2x16x16xf32>,
      %cst_48 = arith.constant 0.000000e+00 : f32
      %47 = vector.broadcast %cst_48 : f32 to vector<2x16x16xf32>
      %c0_49 = arith.constant 0 : index
      %c0_50 = arith.constant 0 : index
      %c0_51 = arith.constant 0 : index
      %48 = vector.load %arg10[%c0_49, %c0_50, %c0_51] : memref<2x16x16xf32, #tpu.memory_space<vmem>>, vector<2x16x16xf32>
      tpu.vector_store %arg10[%c0_49, %c0_50, %c0_51], %47 {strides = array<i32>} : memref<2x16x16xf32, #tpu.memory_space<vmem>>, vector<2x16x16xf32>,
      %cst_52 = arith.constant 0.000000e+00 : f32
      %49 = vector.broadcast %cst_52 : f32 to vector<2x16x16xf32>
      %c0_53 = arith.constant 0 : index
      %c0_54 = arith.constant 0 : index
      %c0_55 = arith.constant 0 : index
      %50 = vector.load %arg11[%c0_53, %c0_54, %c0_55] : memref<2x16x16xf32, #tpu.memory_space<vmem>>, vector<2x16x16xf32>
      tpu.vector_store %arg11[%c0_53, %c0_54, %c0_55], %49 {strides = array<i32>} : memref<2x16x16xf32, #tpu.memory_space<vmem>>, vector<2x16x16xf32>,
    } else {
    }
    %c0 = arith.constant 0 : index
    %c0_1 = arith.constant 0 : index
    %c0_2 = arith.constant 0 : index
    %c0_3 = arith.constant 0 : index
    %3 = vector.load %arg2[%c0, %c0_1, %c0_2, %c0_3] : memref<2x4x16x16xf32, #tpu.memory_space<vmem>>, vector<2x4x16x16xf32>
    %c0_4 = arith.constant 0 : index
    %c0_5 = arith.constant 0 : index
    %c0_6 = arith.constant 0 : index
    %c0_7 = arith.constant 0 : index
    %4 = vector.load %arg3[%c0_4, %c0_5, %c0_6, %c0_7] : memref<2x4x16x16xf32, #tpu.memory_space<vmem>>, vector<2x4x16x16xf32>
    %cst = arith.constant dense<0xFF800000> : vector<2x16x16xf32>
    %5 = vector.multi_reduction <maximumf>, %3, %cst [1] : vector<2x4x16x16xf32> to vector<2x16x16xf32>
    %6 = vector.shape_cast %5 : vector<2x16x16xf32> to vector<2x1x16x16xf32>
    %7 = vector.broadcast %6 : vector<2x1x16x16xf32> to vector<2x4x16x16xf32>
    %8 = arith.subf %3, %7 : vector<2x4x16x16xf32>
    %9 = math.exp %8 : vector<2x4x16x16xf32>
    %10 = vector.shape_cast %6 : vector<2x1x16x16xf32> to vector<2x16x16xf32>
    %cst_8 = arith.constant dense<0.000000e+00> : vector<2x16x16xf32>
    %11 = vector.multi_reduction <add>, %9, %cst_8 [1] : vector<2x4x16x16xf32> to vector<2x16x16xf32>
    %12 = math.log %11 : vector<2x16x16xf32>
    %13 = arith.addf %10, %12 : vector<2x16x16xf32>
    %cst_9 = arith.constant dense<0.000000e+00> : vector<2x16x16xf32>
    %14 = vector.multi_reduction <add>, %4, %cst_9 [1] : vector<2x4x16x16xf32> to vector<2x16x16xf32>
    %15 = arith.mulf %4, %3 : vector<2x4x16x16xf32>
    %cst_10 = arith.constant dense<0.000000e+00> : vector<2x16x16xf32>
    %16 = vector.multi_reduction <add>, %15, %cst_10 [1] : vector<2x4x16x16xf32> to vector<2x16x16xf32>
    %17 = arith.mulf %13, %14 : vector<2x16x16xf32>
    %18 = arith.subf %17, %16 : vector<2x16x16xf32>
    %cst_11 = arith.constant 0.000000e+00 : f32
    %19 = vector.broadcast %cst_11 : f32 to vector<2x1x16x16xf32>
    %20 = arith.subf %19, %6 : vector<2x1x16x16xf32>
    %21 = math.exp %20 : vector<2x1x16x16xf32>
    %22 = vector.broadcast %21 : vector<2x1x16x16xf32> to vector<2x4x16x16xf32>
    %23 = arith.addf %9, %22 : vector<2x4x16x16xf32>
    %24 = arith.divf %9, %23 : vector<2x4x16x16xf32>
    %25 = arith.mulf %24, %4 : vector<2x4x16x16xf32>
    %cst_12 = arith.constant dense<0.000000e+00> : vector<2x16x16xf32>
    %26 = vector.multi_reduction <add>, %25, %cst_12 [1] : vector<2x4x16x16xf32> to vector<2x16x16xf32>
    %cst_13 = arith.constant dense<0.000000e+00> : vector<2x16x16xf32>
    %27 = vector.multi_reduction <add>, %24, %cst_13 [1] : vector<2x4x16x16xf32> to vector<2x16x16xf32>
    %c0_14 = arith.constant 0 : index
    %c0_15 = arith.constant 0 : index
    %c0_16 = arith.constant 0 : index
    %28 = vector.load %arg8[%c0_14, %c0_15, %c0_16] : memref<2x16x16xf32, #tpu.memory_space<vmem>>, vector<2x16x16xf32>
    %29 = arith.addf %28, %18 : vector<2x16x16xf32>
    %c0_17 = arith.constant 0 : index
    %c0_18 = arith.constant 0 : index
    %c0_19 = arith.constant 0 : index
    %30 = vector.load %arg8[%c0_17, %c0_18, %c0_19] : memref<2x16x16xf32, #tpu.memory_space<vmem>>, vector<2x16x16xf32>
    tpu.vector_store %arg8[%c0_17, %c0_18, %c0_19], %29 {strides = array<i32>} : memref<2x16x16xf32, #tpu.memory_space<vmem>>, vector<2x16x16xf32>,
    %c0_20 = arith.constant 0 : index
    %c0_21 = arith.constant 0 : index
    %c0_22 = arith.constant 0 : index
    %31 = vector.load %arg9[%c0_20, %c0_21, %c0_22] : memref<2x16x16xf32, #tpu.memory_space<vmem>>, vector<2x16x16xf32>
    %32 = arith.addf %31, %26 : vector<2x16x16xf32>
    %c0_23 = arith.constant 0 : index
    %c0_24 = arith.constant 0 : index
    %c0_25 = arith.constant 0 : index
    %33 = vector.load %arg9[%c0_23, %c0_24, %c0_25] : memref<2x16x16xf32, #tpu.memory_space<vmem>>, vector<2x16x16xf32>
    tpu.vector_store %arg9[%c0_23, %c0_24, %c0_25], %32 {strides = array<i32>} : memref<2x16x16xf32, #tpu.memory_space<vmem>>, vector<2x16x16xf32>,
    %c0_26 = arith.constant 0 : index
    %c0_27 = arith.constant 0 : index
    %c0_28 = arith.constant 0 : index
    %34 = vector.load %arg10[%c0_26, %c0_27, %c0_28] : memref<2x16x16xf32, #tpu.memory_space<vmem>>, vector<2x16x16xf32>
    %35 = arith.addf %34, %27 : vector<2x16x16xf32>
    %c0_29 = arith.constant 0 : index
    %c0_30 = arith.constant 0 : index
    %c0_31 = arith.constant 0 : index
    %36 = vector.load %arg10[%c0_29, %c0_30, %c0_31] : memref<2x16x16xf32, #tpu.memory_space<vmem>>, vector<2x16x16xf32>
    tpu.vector_store %arg10[%c0_29, %c0_30, %c0_31], %35 {strides = array<i32>} : memref<2x16x16xf32, #tpu.memory_space<vmem>>, vector<2x16x16xf32>,
    %c0_32 = arith.constant 0 : index
    %c0_33 = arith.constant 0 : index
    %c0_34 = arith.constant 0 : index
    %37 = vector.load %arg11[%c0_32, %c0_33, %c0_34] : memref<2x16x16xf32, #tpu.memory_space<vmem>>, vector<2x16x16xf32>
    %38 = arith.addf %37, %14 : vector<2x16x16xf32>
    %c0_35 = arith.constant 0 : index
    %c0_36 = arith.constant 0 : index
    %c0_37 = arith.constant 0 : index
    %39 = vector.load %arg11[%c0_35, %c0_36, %c0_37] : memref<2x16x16xf32, #tpu.memory_space<vmem>>, vector<2x16x16xf32>
    tpu.vector_store %arg11[%c0_35, %c0_36, %c0_37], %38 {strides = array<i32>} : memref<2x16x16xf32, #tpu.memory_space<vmem>>, vector<2x16x16xf32>,
    %c0_i32_38 = arith.constant 0 : i32
    %40 = arith.cmpi eq, %arg1, %c0_i32_38 : i32
    %41 = arith.extui %40 : i1 to i32
    %c0_i32_39 = arith.constant 0 : i32
    %42 = arith.cmpi ne, %41, %c0_i32_39 : i32
    scf.if %42 {
      %c0_40 = arith.constant 0 : index
      %c0_41 = arith.constant 0 : index
      %c0_42 = arith.constant 0 : index
      %43 = vector.load %arg8[%c0_40, %c0_41, %c0_42] : memref<2x16x16xf32, #tpu.memory_space<vmem>>, vector<2x16x16xf32>
      %cst_43 = arith.constant dense<0.000000e+00> : vector<2x16xf32>
      %44 = vector.multi_reduction <add>, %43, %cst_43 [2] : vector<2x16x16xf32> to vector<2x16xf32>
      %45 = vector.shape_cast %44 : vector<2x16xf32> to vector<2x16x1xf32>
      %cst_44 = arith.constant dense<0.000000e+00> : vector<2x1xf32>
      %46 = vector.multi_reduction <add>, %45, %cst_44 [1] : vector<2x16x1xf32> to vector<2x1xf32>
      %47 = vector.shape_cast %46 : vector<2x1xf32> to vector<2x1x1xf32>
      %c0_45 = arith.constant 0 : index
      %c0_46 = arith.constant 0 : index
      %c0_47 = arith.constant 0 : index
      %c0_48 = arith.constant 0 : index
      %48 = vector.load %arg4[%c0_45, %c0_46, %c0_47, %c0_48] : memref<1x2x1x1xf32, #tpu.memory_space<vmem>>, vector<1x2x1x1xf32>
      %49 = vector.shape_cast %48 : vector<1x2x1x1xf32> to vector<2x1x1xf32>
      %50 = vector.shape_cast %47 : vector<2x1x1xf32> to vector<1x2x1x1xf32>
      tpu.vector_store %arg4[%c0_45, %c0_46, %c0_47, %c0_48], %50 {strides = array<i32>} : memref<1x2x1x1xf32, #tpu.memory_space<vmem>>, vector<1x2x1x1xf32>,
      %c0_49 = arith.constant 0 : index
      %c0_50 = arith.constant 0 : index
      %c0_51 = arith.constant 0 : index
      %51 = vector.load %arg9[%c0_49, %c0_50, %c0_51] : memref<2x16x16xf32, #tpu.memory_space<vmem>>, vector<2x16x16xf32>
      %cst_52 = arith.constant dense<0.000000e+00> : vector<2x16xf32>
      %52 = vector.multi_reduction <add>, %51, %cst_52 [2] : vector<2x16x16xf32> to vector<2x16xf32>
      %53 = vector.shape_cast %52 : vector<2x16xf32> to vector<2x16x1xf32>
      %cst_53 = arith.constant dense<0.000000e+00> : vector<2x1xf32>
      %54 = vector.multi_reduction <add>, %53, %cst_53 [1] : vector<2x16x1xf32> to vector<2x1xf32>
      %55 = vector.shape_cast %54 : vector<2x1xf32> to vector<2x1x1xf32>
      %c0_54 = arith.constant 0 : index
      %c0_55 = arith.constant 0 : index
      %c0_56 = arith.constant 0 : index
      %c0_57 = arith.constant 0 : index
      %56 = vector.load %arg5[%c0_54, %c0_55, %c0_56, %c0_57] : memref<1x2x1x1xf32, #tpu.memory_space<vmem>>, vector<1x2x1x1xf32>
      %57 = vector.shape_cast %56 : vector<1x2x1x1xf32> to vector<2x1x1xf32>
      %58 = vector.shape_cast %55 : vector<2x1x1xf32> to vector<1x2x1x1xf32>
      tpu.vector_store %arg5[%c0_54, %c0_55, %c0_56, %c0_57], %58 {strides = array<i32>} : memref<1x2x1x1xf32, #tpu.memory_space<vmem>>, vector<1x2x1x1xf32>,
      %c0_58 = arith.constant 0 : index
      %c0_59 = arith.constant 0 : index
      %c0_60 = arith.constant 0 : index
      %59 = vector.load %arg10[%c0_58, %c0_59, %c0_60] : memref<2x16x16xf32, #tpu.memory_space<vmem>>, vector<2x16x16xf32>
      %cst_61 = arith.constant dense<0.000000e+00> : vector<2x16xf32>
      %60 = vector.multi_reduction <add>, %59, %cst_61 [2] : vector<2x16x16xf32> to vector<2x16xf32>
      %61 = vector.shape_cast %60 : vector<2x16xf32> to vector<2x16x1xf32>
      %cst_62 = arith.constant dense<0.000000e+00> : vector<2x1xf32>
      %62 = vector.multi_reduction <add>, %61, %cst_62 [1] : vector<2x16x1xf32> to vector<2x1xf32>
      %63 = vector.shape_cast %62 : vector<2x1xf32> to vector<2x1x1xf32>
      %c0_63 = arith.constant 0 : index
      %c0_64 = arith.constant 0 : index
      %c0_65 = arith.constant 0 : index
      %c0_66 = arith.constant 0 : index
      %64 = vector.load %arg6[%c0_63, %c0_64, %c0_65, %c0_66] : memref<1x2x1x1xf32, #tpu.memory_space<vmem>>, vector<1x2x1x1xf32>
      %65 = vector.shape_cast %64 : vector<1x2x1x1xf32> to vector<2x1x1xf32>
      %66 = vector.shape_cast %63 : vector<2x1x1xf32> to vector<1x2x1x1xf32>
      tpu.vector_store %arg6[%c0_63, %c0_64, %c0_65, %c0_66], %66 {strides = array<i32>} : memref<1x2x1x1xf32, #tpu.memory_space<vmem>>, vector<1x2x1x1xf32>,
      %c0_67 = arith.constant 0 : index
      %c0_68 = arith.constant 0 : index
      %c0_69 = arith.constant 0 : index
      %67 = vector.load %arg11[%c0_67, %c0_68, %c0_69] : memref<2x16x16xf32, #tpu.memory_space<vmem>>, vector<2x16x16xf32>
      %cst_70 = arith.constant dense<0.000000e+00> : vector<2x16xf32>
      %68 = vector.multi_reduction <add>, %67, %cst_70 [2] : vector<2x16x16xf32> to vector<2x16xf32>
      %69 = vector.shape_cast %68 : vector<2x16xf32> to vector<2x16x1xf32>
      %cst_71 = arith.constant dense<0.000000e+00> : vector<2x1xf32>
      %70 = vector.multi_reduction <add>, %69, %cst_71 [1] : vector<2x16x1xf32> to vector<2x1xf32>
      %71 = vector.shape_cast %70 : vector<2x1xf32> to vector<2x1x1xf32>
      %c0_72 = arith.constant 0 : index
      %c0_73 = arith.constant 0 : index
      %c0_74 = arith.constant 0 : index
      %c0_75 = arith.constant 0 : index
      %72 = vector.load %arg7[%c0_72, %c0_73, %c0_74, %c0_75] : memref<1x2x1x1xf32, #tpu.memory_space<vmem>>, vector<1x2x1x1xf32>
      %73 = vector.shape_cast %72 : vector<1x2x1x1xf32> to vector<2x1x1xf32>
      %74 = vector.shape_cast %71 : vector<2x1x1xf32> to vector<1x2x1x1xf32>
      tpu.vector_store %arg7[%c0_72, %c0_73, %c0_74, %c0_75], %74 {strides = array<i32>} : memref<1x2x1x1xf32, #tpu.memory_space<vmem>>, vector<1x2x1x1xf32>,
    } else {
    }
    return
  }
  func.func @transform_0(%arg0: i32, %arg1: i32) -> (i32, i32, i32, i32) {
    %c1_i32 = arith.constant 1 : i32
    %0 = arith.muli %arg0, %c1_i32 : i32
    %1 = arith.addi %0, %arg1 : i32
    %c0_i32 = arith.constant 0 : i32
    %2 = arith.minsi %1, %c0_i32 : i32
    %c0_i32_0 = arith.constant 0 : i32
    %c0_i32_1 = arith.constant 0 : i32
    %c0_i32_2 = arith.constant 0 : i32
    %c0_i32_3 = arith.constant 0 : i32
    return %c0_i32_0, %c0_i32_1, %2, %c0_i32_2 : i32, i32, i32, i32
  }
  func.func @transform_1(%arg0: i32, %arg1: i32) -> (i32, i32, i32, i32) {
    %c1_i32 = arith.constant 1 : i32
    %0 = arith.muli %arg0, %c1_i32 : i32
    %1 = arith.addi %0, %arg1 : i32
    %c0_i32 = arith.constant 0 : i32
    %2 = arith.minsi %1, %c0_i32 : i32
    %c0_i32_0 = arith.constant 0 : i32
    %c0_i32_1 = arith.constant 0 : i32
    %c0_i32_2 = arith.constant 0 : i32
    %c0_i32_3 = arith.constant 0 : i32
    return %c0_i32_0, %c0_i32_1, %2, %c0_i32_2 : i32, i32, i32, i32
  }
  func.func @transform_2(%arg0: i32, %arg1: i32) -> (i32, i32, i32, i32) {
    %c0_i32 = arith.constant 0 : i32
    %c0_i32_0 = arith.constant 0 : i32
    %c0_i32_1 = arith.constant 0 : i32
    %c0_i32_2 = arith.constant 0 : i32
    return %arg0, %c0_i32, %c0_i32_0, %c0_i32_1 : i32, i32, i32, i32
  }
  func.func @transform_3(%arg0: i32, %arg1: i32) -> (i32, i32, i32, i32) {
    %c0_i32 = arith.constant 0 : i32
    %c0_i32_0 = arith.constant 0 : i32
    %c0_i32_1 = arith.constant 0 : i32
    %c0_i32_2 = arith.constant 0 : i32
    return %arg0, %c0_i32, %c0_i32_0, %c0_i32_1 : i32, i32, i32, i32
  }
  func.func @transform_4(%arg0: i32, %arg1: i32) -> (i32, i32, i32, i32) {
    %c0_i32 = arith.constant 0 : i32
    %c0_i32_0 = arith.constant 0 : i32
    %c0_i32_1 = arith.constant 0 : i32
    %c0_i32_2 = arith.constant 0 : i32
    return %arg0, %c0_i32, %c0_i32_0, %c0_i32_1 : i32, i32, i32, i32
  }
  func.func @transform_5(%arg0: i32, %arg1: i32) -> (i32, i32, i32, i32) {
    %c0_i32 = arith.constant 0 : i32
    %c0_i32_0 = arith.constant 0 : i32
    %c0_i32_1 = arith.constant 0 : i32
    %c0_i32_2 = arith.constant 0 : i32
    return %arg0, %c0_i32, %c0_i32_0, %c0_i32_1 : i32, i32, i32, i32
  }
}

</mosaic_0001>

<llo_original>
// kernel: tpu_custom_call.1
$region0: #{tpu_custom_call.1}
  #allocation0 [shape = 'u32[]', space=smem, size = 0x4, offset = 0x4, fixed_abs, tag = 'smem constant byte address 0x4 - core index']
  #allocation1 [shape = 'u32[144,128]{1,0:T(1,128)}', space=vmem, size = 0x12000, scoped, tag = 'internal scratch']
  #allocation2 [shape = 'f32[2,16,16]{2,1,0:T(8,128)}', space=vmem, size = 0x4000, scoped, tag = 'scratch operand']
  #allocation3 [shape = 'f32[2,16,16]{2,1,0:T(8,128)}', space=vmem, size = 0x4000, scoped, tag = 'scratch operand']
  #allocation4 [shape = 'f32[2,16,16]{2,1,0:T(8,128)}', space=vmem, size = 0x4000, scoped, tag = 'scratch operand']
  #allocation5 [shape = 'f32[2,16,16]{2,1,0:T(8,128)}', space=vmem, size = 0x4000, scoped, tag = 'scratch operand']
  %s0 = inlined_call_operand.hbm [shape: f32[2,4,16,16], index: 0, kind: input, shape index: {}]
  %s1 = inlined_call_operand.hbm [shape: f32[2,4,16,16], index: 1, kind: input, shape index: {}]
  %s2 = inlined_call_operand.vmem [shape: f32[1,2,1,1], index: 2, kind: output, shape index: {0}]
  %s3 = inlined_call_operand.vmem [shape: f32[1,2,1,1], index: 3, kind: output, shape index: {1}]
  %s4 = inlined_call_operand.vmem [shape: f32[1,2,1,1], index: 4, kind: output, shape index: {2}]
  %s5 = inlined_call_operand.vmem [shape: f32[1,2,1,1], index: 5, kind: output, shape index: {3}]
  %6 = xla_tuple %s2, %s3, %s4, %s5
  %s7 = sld [smem:[#allocation0]]
  $region58: #{tpu_custom_call.1} parent=0
    _
  %s9 = ssub.s32 1, %s7
  %s10 = scalar_select 0, %s9, %s7
  $region1: #{tpu_custom_call.1} parent=0
    #allocation6 [shape = 'u8[65536]{0}', space=vmem, size = 0x10000, scoped, tag = 'input window, operand 0, single buffered']
    #allocation7 [shape = 's32[1]{0}', space=sflag, size = 0x4, scoped, tag = 'scoped memory for tpu_custom_call.1']
    #allocation8 [shape = 'u8[65536]{0}', space=vmem, size = 0x10000, scoped, tag = 'input window, operand 1, single buffered']
    #allocation9 [shape = 's32[1]{0}', space=sflag, size = 0x4, scoped, tag = 'scoped memory for tpu_custom_call.1']
    %11 = vsyncpa [#allocation7], 0
    %12 = vsyncpa [#allocation9], 0
    // Predicated region
    $region2: #{tpu_custom_call.1} parent=1 // pred_check
      _
    $region3: #{tpu_custom_call.1} parent=1 // pred_check_branch
      %14 = sbr.rel (0) target = $region5
    $region4: #{tpu_custom_call.1} parent=1 // pred_region
      %s15 = sadd.s32 0, 0
      %p16 = scmp.lt.s32.totalorder %s15, 0
      %s17 = scalar_select %p16, %s15, 0
      %s18 = smul.u32 2, %s17
      %s20 = ssub.s32 2048, 2048
      %21 = vsyncadd [#allocation7], %s20
      %s22 = smul.addr %s18, 128
      %s23 = scalar_lea.hbm %s0, %s22
      %s24 = sshll.u32 [#allocation6], 4
      %s25 = int_to_ptr.vmem [resolvable:$true] %s24
      %30 = dma.hbm_to_vmem [thread:$0]  %s23, 2048, %s25, [#allocation7], 128, 128, 8
    $region5: #{tpu_custom_call.1} parent=1 // pred_fallthru
      _
    // Predicated region
    $region6: #{tpu_custom_call.1} parent=1 // pred_check
      _
    $region7: #{tpu_custom_call.1} parent=1 // pred_check_branch
      %32 = sbr.rel (0) target = $region9
    $region8: #{tpu_custom_call.1} parent=1 // pred_region
      %s33 = sadd.s32 0, 0
      %p34 = scmp.lt.s32.totalorder %s33, 0
      %s35 = scalar_select %p34, %s33, 0
      %s36 = smul.u32 2, %s35
      %s38 = ssub.s32 2048, 2048
      %39 = vsyncadd [#allocation9], %s38
      %s40 = smul.addr %s36, 128
      %s41 = scalar_lea.hbm %s1, %s40
      %s42 = sshll.u32 [#allocation8], 4
      %s43 = int_to_ptr.vmem [resolvable:$true] %s42
      %48 = dma.hbm_to_vmem [thread:$0]  %s41, 2048, %s43, [#allocation9], 128, 128, 8
    $region9: #{tpu_custom_call.1} parent=1 // pred_fallthru
      _
    // Predicated region
    $region10: #{tpu_custom_call.1} parent=1 // pred_check
      _
    $region11: #{tpu_custom_call.1} parent=1 // pred_check_branch
      %50 = sbr.rel (0) target = $region13
    $region12: #{tpu_custom_call.1} parent=1 // pred_region
      %51 = dma.done [#allocation7], 2048
    $region13: #{tpu_custom_call.1} parent=1 // pred_fallthru
      _
    // Predicated region
    $region14: #{tpu_custom_call.1} parent=1 // pred_check
      _
    $region15: #{tpu_custom_call.1} parent=1 // pred_check_branch
      %53 = sbr.rel (0) target = $region17
    $region16: #{tpu_custom_call.1} parent=1 // pred_region
      %54 = dma.done [#allocation9], 2048
    $region17: #{tpu_custom_call.1} parent=1 // pred_fallthru
      _
    %s55 = sadd.s32 0, 0
    %p56 = scmp.lt.s32.totalorder %s55, 0
    %s57 = scalar_select %p56, %s55, 0
    %s58 = smul.u32 2, %s57
    %s59 = sadd.s32 0, 0
    %p60 = scmp.lt.s32.totalorder %s59, 0
    %s61 = scalar_select %p60, %s59, 0
    %s62 = smul.u32 2, %s61
    %p63 = scmp.eq.s32.totalorder 0, 0
    // Predicated region
    $region18: #{tpu_custom_call.1} parent=1 // pred_check
      %p64 = pneg %p63
    $region19: #{tpu_custom_call.1} parent=1 // pred_check_branch
      %66 = sbr.rel (%p64) target = $region21
    $region20: #{tpu_custom_call.1} parent=1 // pred_region
      %vm67 = vcmask 130048
      %68 = vst.msk [vmem:[#allocation2] sm:$0xff] %vm67, 0.0
      %69 = vst.msk [vmem:[#allocation2 + $0x8] sm:$0xff] %vm67, 0.0
      %70 = vst.msk [vmem:[#allocation2 + $0x10] sm:$0xff] %vm67, 0.0
      %71 = vst.msk [vmem:[#allocation2 + $0x18] sm:$0xff] %vm67, 0.0
      %72 = vst.msk [vmem:[#allocation3] sm:$0xff] %vm67, 0.0
      %73 = vst.msk [vmem:[#allocation3 + $0x8] sm:$0xff] %vm67, 0.0
      %74 = vst.msk [vmem:[#allocation3 + $0x10] sm:$0xff] %vm67, 0.0
      %75 = vst.msk [vmem:[#allocation3 + $0x18] sm:$0xff] %vm67, 0.0
      %76 = vst.msk [vmem:[#allocation4] sm:$0xff] %vm67, 0.0
      %77 = vst.msk [vmem:[#allocation4 + $0x8] sm:$0xff] %vm67, 0.0
      %78 = vst.msk [vmem:[#allocation4 + $0x10] sm:$0xff] %vm67, 0.0
      %79 = vst.msk [vmem:[#allocation4 + $0x18] sm:$0xff] %vm67, 0.0
      %80 = vst.msk [vmem:[#allocation5] sm:$0xff] %vm67, 0.0
      %81 = vst.msk [vmem:[#allocation5 + $0x8] sm:$0xff] %vm67, 0.0
      %82 = vst.msk [vmem:[#allocation5 + $0x10] sm:$0xff] %vm67, 0.0
      %83 = vst.msk [vmem:[#allocation5 + $0x18] sm:$0xff] %vm67, 0.0
    $region21: #{tpu_custom_call.1} parent=1 // pred_fallthru
      _
    %v84 = vld [vmem:[#allocation6] sm:$0xff]
    %v85 = vld [vmem:[#allocation6 + $0x8] sm:$0xff]
    %v86 = vld [vmem:[#allocation6 + $0x10] sm:$0xff]
    %v87 = vld [vmem:[#allocation6 + $0x18] sm:$0xff]
    %v88 = vld [vmem:[#allocation6 + $0x20] sm:$0xff]
    %v89 = vld [vmem:[#allocation6 + $0x28] sm:$0xff]
    %v90 = vld [vmem:[#allocation6 + $0x30] sm:$0xff]
    %v91 = vld [vmem:[#allocation6 + $0x38] sm:$0xff]
    %v92 = vld [vmem:[#allocation6 + $0x40] sm:$0xff]
    %v93 = vld [vmem:[#allocation6 + $0x48] sm:$0xff]
    %v94 = vld [vmem:[#allocation6 + $0x50] sm:$0xff]
    %v95 = vld [vmem:[#allocation6 + $0x58] sm:$0xff]
    %v96 = vld [vmem:[#allocation6 + $0x60] sm:$0xff]
    %v97 = vld [vmem:[#allocation6 + $0x68] sm:$0xff]
    %v98 = vld [vmem:[#allocation6 + $0x70] sm:$0xff]
    %v99 = vld [vmem:[#allocation6 + $0x78] sm:$0xff]
    %v100 = vld [vmem:[#allocation8] sm:$0xff]
    %v101 = vld [vmem:[#allocation8 + $0x8] sm:$0xff]
    %v102 = vld [vmem:[#allocation8 + $0x10] sm:$0xff]
    %v103 = vld [vmem:[#allocation8 + $0x18] sm:$0xff]
    %v104 = vld [vmem:[#allocation8 + $0x20] sm:$0xff]
    %v105 = vld [vmem:[#allocation8 + $0x28] sm:$0xff]
    %v106 = vld [vmem:[#allocation8 + $0x30] sm:$0xff]
    %v107 = vld [vmem:[#allocation8 + $0x38] sm:$0xff]
    %v108 = vld [vmem:[#allocation8 + $0x40] sm:$0xff]
    %v109 = vld [vmem:[#allocation8 + $0x48] sm:$0xff]
    %v110 = vld [vmem:[#allocation8 + $0x50] sm:$0xff]
    %v111 = vld [vmem:[#allocation8 + $0x58] sm:$0xff]
    %v112 = vld [vmem:[#allocation8 + $0x60] sm:$0xff]
    %v113 = vld [vmem:[#allocation8 + $0x68] sm:$0xff]
    %v114 = vld [vmem:[#allocation8 + $0x70] sm:$0xff]
    %v115 = vld [vmem:[#allocation8 + $0x78] sm:$0xff]
    %vm116 = vcmask 130048
    %v117 = vsel %vm116, %v84, -inf
    %v118 = vsel %vm116, %v86, -inf
    %v119 = vmax.f32 %v117, %v118
    %v120 = vsel %vm116, %v88, -inf
    %v121 = vmax.f32 %v119, %v120
    %v122 = vsel %vm116, %v90, -inf
    %v123 = vmax.f32 %v121, %v122
    %v124 = vsel %vm116, %v85, -inf
    %v125 = vsel %vm116, %v87, -inf
    %v126 = vmax.f32 %v124, %v125
    %v127 = vsel %vm116, %v89, -inf
    %v128 = vmax.f32 %v126, %v127
    %v129 = vsel %vm116, %v91, -inf
    %v130 = vmax.f32 %v128, %v129
    %v131 = vsel %vm116, %v92, -inf
    %v132 = vsel %vm116, %v94, -inf
    %v133 = vmax.f32 %v131, %v132
    %v134 = vsel %vm116, %v96, -inf
    %v135 = vmax.f32 %v133, %v134
    %v136 = vsel %vm116, %v98, -inf
    %v137 = vmax.f32 %v135, %v136
    %v138 = vsel %vm116, %v93, -inf
    %v139 = vsel %vm116, %v95, -inf
    %v140 = vmax.f32 %v138, %v139
    %v141 = vsel %vm116, %v97, -inf
    %v142 = vmax.f32 %v140, %v141
    %v143 = vsel %vm116, %v99, -inf
    %v144 = vmax.f32 %v142, %v143
    %v145 = vsub.f32 %v84, %v123
    %v146 = vsub.f32 %v85, %v130
    %v147 = vsub.f32 %v86, %v123
    %v148 = vsub.f32 %v87, %v130
    %v149 = vsub.f32 %v88, %v123
    %v150 = vsub.f32 %v89, %v130
    %v151 = vsub.f32 %v90, %v123
    %v152 = vsub.f32 %v91, %v130
    %v153 = vsub.f32 %v92, %v137
    %v154 = vsub.f32 %v93, %v144
    %v155 = vsub.f32 %v94, %v137
    %v156 = vsub.f32 %v95, %v144
    %v157 = vsub.f32 %v96, %v137
    %v158 = vsub.f32 %v97, %v144
    %v159 = vsub.f32 %v98, %v137
    %v160 = vsub.f32 %v99, %v144
    %v161 = vmul.f32 %v145, 1.442695
    %v162 = vpow.pop %v161
    %v163 = vmul.f32 %v146, 1.442695
    %v164 = vpow.pop %v163
    %v165 = vmul.f32 %v147, 1.442695
    %v166 = vpow.pop %v165
    %v167 = vmul.f32 %v148, 1.442695
    %v168 = vpow.pop %v167
    %v169 = vmul.f32 %v149, 1.442695
    %v170 = vpow.pop %v169
    %v171 = vmul.f32 %v150, 1.442695
    %v172 = vpow.pop %v171
    %v173 = vmul.f32 %v151, 1.442695
    %v174 = vpow.pop %v173
    %v175 = vmul.f32 %v152, 1.442695
    %v176 = vpow.pop %v175
    %v177 = vmul.f32 %v153, 1.442695
    %v178 = vpow.pop %v177
    %v179 = vmul.f32 %v154, 1.442695
    %v180 = vpow.pop %v179
    %v181 = vmul.f32 %v155, 1.442695
    %v182 = vpow.pop %v181
    %v183 = vmul.f32 %v156, 1.442695
    %v184 = vpow.pop %v183
    %v185 = vmul.f32 %v157, 1.442695
    %v186 = vpow.pop %v185
    %v187 = vmul.f32 %v158, 1.442695
    %v188 = vpow.pop %v187
    %v189 = vmul.f32 %v159, 1.442695
    %v190 = vpow.pop %v189
    %v191 = vmul.f32 %v160, 1.442695
    %v192 = vpow.pop %v191
    %v193 = vsel %vm116, %v162, 0.0
    %v194 = vsel %vm116, %v166, 0.0
    %v195 = vadd.f32 %v193, %v194
    %v196 = vsel %vm116, %v170, 0.0
    %v197 = vadd.f32 %v195, %v196
    %v198 = vsel %vm116, %v174, 0.0
    %v199 = vadd.f32 %v197, %v198
    %v200 = vsel %vm116, %v164, 0.0
    %v201 = vsel %vm116, %v168, 0.0
    %v202 = vadd.f32 %v200, %v201
    %v203 = vsel %vm116, %v172, 0.0
    %v204 = vadd.f32 %v202, %v203
    %v205 = vsel %vm116, %v176, 0.0
    %v206 = vadd.f32 %v204, %v205
    %v207 = vsel %vm116, %v178, 0.0
    %v208 = vsel %vm116, %v182, 0.0
    %v209 = vadd.f32 %v207, %v208
    %v210 = vsel %vm116, %v186, 0.0
    %v211 = vadd.f32 %v209, %v210
    %v212 = vsel %vm116, %v190, 0.0
    %v213 = vadd.f32 %v211, %v212
    %v214 = vsel %vm116, %v180, 0.0
    %v215 = vsel %vm116, %v184, 0.0
    %v216 = vadd.f32 %v214, %v215
    %v217 = vsel %vm116, %v188, 0.0
    %v218 = vadd.f32 %v216, %v217
    %v219 = vsel %vm116, %v192, 0.0
    %v220 = vadd.f32 %v218, %v219
    %v221 = vlog2.pop %v199
    %v222 = vmul.f32 %v221, 0.6931472
    %v223 = vlog2.pop %v206
    %v224 = vmul.f32 %v223, 0.6931472
    %v225 = vlog2.pop %v213
    %v226 = vmul.f32 %v225, 0.6931472
    %v227 = vlog2.pop %v220
    %v228 = vmul.f32 %v227, 0.6931472
    %v229 = vadd.f32 %v123, %v222
    %v230 = vadd.f32 %v130, %v224
    %v231 = vadd.f32 %v137, %v226
    %v232 = vadd.f32 %v144, %v228
    %v233 = vsel %vm116, %v100, 0.0
    %v234 = vsel %vm116, %v102, 0.0
    %v235 = vadd.f32 %v233, %v234
    %v236 = vsel %vm116, %v104, 0.0
    %v237 = vadd.f32 %v235, %v236
    %v238 = vsel %vm116, %v106, 0.0
    %v239 = vadd.f32 %v237, %v238
    %v240 = vsel %vm116, %v101, 0.0
    %v241 = vsel %vm116, %v103, 0.0
    %v242 = vadd.f32 %v240, %v241
    %v243 = vsel %vm116, %v105, 0.0
    %v244 = vadd.f32 %v242, %v243
    %v245 = vsel %vm116, %v107, 0.0
    %v246 = vadd.f32 %v244, %v245
    %v247 = vsel %vm116, %v108, 0.0
    %v248 = vsel %vm116, %v110, 0.0
    %v249 = vadd.f32 %v247, %v248
    %v250 = vsel %vm116, %v112, 0.0
    %v251 = vadd.f32 %v249, %v250
    %v252 = vsel %vm116, %v114, 0.0
    %v253 = vadd.f32 %v251, %v252
    %v254 = vsel %vm116, %v109, 0.0
    %v255 = vsel %vm116, %v111, 0.0
    %v256 = vadd.f32 %v254, %v255
    %v257 = vsel %vm116, %v113, 0.0
    %v258 = vadd.f32 %v256, %v257
    %v259 = vsel %vm116, %v115, 0.0
    %v260 = vadd.f32 %v258, %v259
    %v261 = vmul.f32 %v100, %v84
    %v262 = vmul.f32 %v101, %v85
    %v263 = vmul.f32 %v102, %v86
    %v264 = vmul.f32 %v103, %v87
    %v265 = vmul.f32 %v104, %v88
    %v266 = vmul.f32 %v105, %v89
    %v267 = vmul.f32 %v106, %v90
    %v268 = vmul.f32 %v107, %v91
    %v269 = vmul.f32 %v108, %v92
    %v270 = vmul.f32 %v109, %v93
    %v271 = vmul.f32 %v110, %v94
    %v272 = vmul.f32 %v111, %v95
    %v273 = vmul.f32 %v112, %v96
    %v274 = vmul.f32 %v113, %v97
    %v275 = vmul.f32 %v114, %v98
    %v276 = vmul.f32 %v115, %v99
    %v277 = vsel %vm116, %v261, 0.0
    %v278 = vsel %vm116, %v263, 0.0
    %v279 = vadd.f32 %v277, %v278
    %v280 = vsel %vm116, %v265, 0.0
    %v281 = vadd.f32 %v279, %v280
    %v282 = vsel %vm116, %v267, 0.0
    %v283 = vadd.f32 %v281, %v282
    %v284 = vsel %vm116, %v262, 0.0
    %v285 = vsel %vm116, %v264, 0.0
    %v286 = vadd.f32 %v284, %v285
    %v287 = vsel %vm116, %v266, 0.0
    %v288 = vadd.f32 %v286, %v287
    %v289 = vsel %vm116, %v268, 0.0
    %v290 = vadd.f32 %v288, %v289
    %v291 = vsel %vm116, %v269, 0.0
    %v292 = vsel %vm116, %v271, 0.0
    %v293 = vadd.f32 %v291, %v292
    %v294 = vsel %vm116, %v273, 0.0
    %v295 = vadd.f32 %v293, %v294
    %v296 = vsel %vm116, %v275, 0.0
    %v297 = vadd.f32 %v295, %v296
    %v298 = vsel %vm116, %v270, 0.0
    %v299 = vsel %vm116, %v272, 0.0
    %v300 = vadd.f32 %v298, %v299
    %v301 = vsel %vm116, %v274, 0.0
    %v302 = vadd.f32 %v300, %v301
    %v303 = vsel %vm116, %v276, 0.0
    %v304 = vadd.f32 %v302, %v303
    %v305 = vmul.f32 %v229, %v239
    %v306 = vmul.f32 %v230, %v246
    %v307 = vmul.f32 %v231, %v253
    %v308 = vmul.f32 %v232, %v260
    %v309 = vsub.f32 %v305, %v283
    %v310 = vsub.f32 %v306, %v290
    %v311 = vsub.f32 %v307, %v297
    %v312 = vsub.f32 %v308, %v304
    %v313 = vsub.f32 0.0, %v123
    %v314 = vsub.f32 0.0, %v130
    %v315 = vsub.f32 0.0, %v137
    %v316 = vsub.f32 0.0, %v144
    %v317 = vmul.f32 %v313, 1.442695
    %v318 = vpow.pop %v317
    %v319 = vmul.f32 %v314, 1.442695
    %v320 = vpow.pop %v319
    %v321 = vmul.f32 %v315, 1.442695
    %v322 = vpow.pop %v321
    %v323 = vmul.f32 %v316, 1.442695
    %v324 = vpow.pop %v323
    %v325 = vadd.f32 %v162, %v318
    %v326 = vadd.f32 %v164, %v320
    %v327 = vadd.f32 %v166, %v318
    %v328 = vadd.f32 %v168, %v320
    %v329 = vadd.f32 %v170, %v318
    %v330 = vadd.f32 %v172, %v320
    %v331 = vadd.f32 %v174, %v318
    %v332 = vadd.f32 %v176, %v320
    %v333 = vadd.f32 %v178, %v322
    %v334 = vadd.f32 %v180, %v324
    %v335 = vadd.f32 %v182, %v322
    %v336 = vadd.f32 %v184, %v324
    %v337 = vadd.f32 %v186, %v322
    %v338 = vadd.f32 %v188, %v324
    %v339 = vadd.f32 %v190, %v322
    %v340 = vadd.f32 %v192, %v324
    %v341 = vrcp.pop %v325
    %v342 = vmul.f32 %v162, %v341
    %v343 = vrcp.pop %v326
    %v344 = vmul.f32 %v164, %v343
    %v345 = vrcp.pop %v327
    %v346 = vmul.f32 %v166, %v345
    %v347 = vrcp.pop %v328
    %v348 = vmul.f32 %v168, %v347
    %v349 = vrcp.pop %v329
    %v350 = vmul.f32 %v170, %v349
    %v351 = vrcp.pop %v330
    %v352 = vmul.f32 %v172, %v351
    %v353 = vrcp.pop %v331
    %v354 = vmul.f32 %v174, %v353
    %v355 = vrcp.pop %v332
    %v356 = vmul.f32 %v176, %v355
    %v357 = vrcp.pop %v333
    %v358 = vmul.f32 %v178, %v357
    %v359 = vrcp.pop %v334
    %v360 = vmul.f32 %v180, %v359
    %v361 = vrcp.pop %v335
    %v362 = vmul.f32 %v182, %v361
    %v363 = vrcp.pop %v336
    %v364 = vmul.f32 %v184, %v363
    %v365 = vrcp.pop %v337
    %v366 = vmul.f32 %v186, %v365
    %v367 = vrcp.pop %v338
    %v368 = vmul.f32 %v188, %v367
    %v369 = vrcp.pop %v339
    %v370 = vmul.f32 %v190, %v369
    %v371 = vrcp.pop %v340
    %v372 = vmul.f32 %v192, %v371
    %v373 = vmul.f32 %v342, %v100
    %v374 = vmul.f32 %v344, %v101
    %v375 = vmul.f32 %v346, %v102
    %v376 = vmul.f32 %v348, %v103
    %v377 = vmul.f32 %v350, %v104
    %v378 = vmul.f32 %v352, %v105
    %v379 = vmul.f32 %v354, %v106
    %v380 = vmul.f32 %v356, %v107
    %v381 = vmul.f32 %v358, %v108
    %v382 = vmul.f32 %v360, %v109
    %v383 = vmul.f32 %v362, %v110
    %v384 = vmul.f32 %v364, %v111
    %v385 = vmul.f32 %v366, %v112
    %v386 = vmul.f32 %v368, %v113
    %v387 = vmul.f32 %v370, %v114
    %v388 = vmul.f32 %v372, %v115
    %v389 = vsel %vm116, %v373, 0.0
    %v390 = vsel %vm116, %v375, 0.0
    %v391 = vadd.f32 %v389, %v390
    %v392 = vsel %vm116, %v377, 0.0
    %v393 = vadd.f32 %v391, %v392
    %v394 = vsel %vm116, %v379, 0.0
    %v395 = vadd.f32 %v393, %v394
    %v396 = vsel %vm116, %v374, 0.0
    %v397 = vsel %vm116, %v376, 0.0
    %v398 = vadd.f32 %v396, %v397
    %v399 = vsel %vm116, %v378, 0.0
    %v400 = vadd.f32 %v398, %v399
    %v401 = vsel %vm116, %v380, 0.0
    %v402 = vadd.f32 %v400, %v401
    %v403 = vsel %vm116, %v381, 0.0
    %v404 = vsel %vm116, %v383, 0.0
    %v405 = vadd.f32 %v403, %v404
    %v406 = vsel %vm116, %v385, 0.0
    %v407 = vadd.f32 %v405, %v406
    %v408 = vsel %vm116, %v387, 0.0
    %v409 = vadd.f32 %v407, %v408
    %v410 = vsel %vm116, %v382, 0.0
    %v411 = vsel %vm116, %v384, 0.0
    %v412 = vadd.f32 %v410, %v411
    %v413 = vsel %vm116, %v386, 0.0
    %v414 = vadd.f32 %v412, %v413
    %v415 = vsel %vm116, %v388, 0.0
    %v416 = vadd.f32 %v414, %v415
    %v417 = vsel %vm116, %v342, 0.0
    %v418 = vsel %vm116, %v346, 0.0
    %v419 = vadd.f32 %v417, %v418
    %v420 = vsel %vm116, %v350, 0.0
    %v421 = vadd.f32 %v419, %v420
    %v422 = vsel %vm116, %v354, 0.0
    %v423 = vadd.f32 %v421, %v422
    %v424 = vsel %vm116, %v344, 0.0
    %v425 = vsel %vm116, %v348, 0.0
    %v426 = vadd.f32 %v424, %v425
    %v427 = vsel %vm116, %v352, 0.0
    %v428 = vadd.f32 %v426, %v427
    %v429 = vsel %vm116, %v356, 0.0
    %v430 = vadd.f32 %v428, %v429
    %v431 = vsel %vm116, %v358, 0.0
    %v432 = vsel %vm116, %v362, 0.0
    %v433 = vadd.f32 %v431, %v432
    %v434 = vsel %vm116, %v366, 0.0
    %v435 = vadd.f32 %v433, %v434
    %v436 = vsel %vm116, %v370, 0.0
    %v437 = vadd.f32 %v435, %v436
    %v438 = vsel %vm116, %v360, 0.0
    %v439 = vsel %vm116, %v364, 0.0
    %v440 = vadd.f32 %v438, %v439
    %v441 = vsel %vm116, %v368, 0.0
    %v442 = vadd.f32 %v440, %v441
    %v443 = vsel %vm116, %v372, 0.0
    %v444 = vadd.f32 %v442, %v443
    %v445 = vld [vmem:[#allocation2] sm:$0xff]
    %v446 = vld [vmem:[#allocation2 + $0x8] sm:$0xff]
    %v447 = vld [vmem:[#allocation2 + $0x10] sm:$0xff]
    %v448 = vld [vmem:[#allocation2 + $0x18] sm:$0xff]
    %v449 = vadd.f32 %v445, %v309
    %v450 = vadd.f32 %v446, %v310
    %v451 = vadd.f32 %v447, %v311
    %v452 = vadd.f32 %v448, %v312
    %453 = vst.msk [vmem:[#allocation2] sm:$0xff] %vm116, %v449
    %454 = vst.msk [vmem:[#allocation2 + $0x8] sm:$0xff] %vm116, %v450
    %455 = vst.msk [vmem:[#allocation2 + $0x10] sm:$0xff] %vm116, %v451
    %456 = vst.msk [vmem:[#allocation2 + $0x18] sm:$0xff] %vm116, %v452
    %v457 = vld [vmem:[#allocation3] sm:$0xff]
    %v458 = vld [vmem:[#allocation3 + $0x8] sm:$0xff]
    %v459 = vld [vmem:[#allocation3 + $0x10] sm:$0xff]
    %v460 = vld [vmem:[#allocation3 + $0x18] sm:$0xff]
    %v461 = vadd.f32 %v457, %v395
    %v462 = vadd.f32 %v458, %v402
    %v463 = vadd.f32 %v459, %v409
    %v464 = vadd.f32 %v460, %v416
    %465 = vst.msk [vmem:[#allocation3] sm:$0xff] %vm116, %v461
    %466 = vst.msk [vmem:[#allocation3 + $0x8] sm:$0xff] %vm116, %v462
    %467 = vst.msk [vmem:[#allocation3 + $0x10] sm:$0xff] %vm116, %v463
    %468 = vst.msk [vmem:[#allocation3 + $0x18] sm:$0xff] %vm116, %v464
    %v469 = vld [vmem:[#allocation4] sm:$0xff]
    %v470 = vld [vmem:[#allocation4 + $0x8] sm:$0xff]
    %v471 = vld [vmem:[#allocation4 + $0x10] sm:$0xff]
    %v472 = vld [vmem:[#allocation4 + $0x18] sm:$0xff]
    %v473 = vadd.f32 %v469, %v423
    %v474 = vadd.f32 %v470, %v430
    %v475 = vadd.f32 %v471, %v437
    %v476 = vadd.f32 %v472, %v444
    %477 = vst.msk [vmem:[#allocation4] sm:$0xff] %vm116, %v473
    %478 = vst.msk [vmem:[#allocation4 + $0x8] sm:$0xff] %vm116, %v474
    %479 = vst.msk [vmem:[#allocation4 + $0x10] sm:$0xff] %vm116, %v475
    %480 = vst.msk [vmem:[#allocation4 + $0x18] sm:$0xff] %vm116, %v476
    %v481 = vld [vmem:[#allocation5] sm:$0xff]
    %v482 = vld [vmem:[#allocation5 + $0x8] sm:$0xff]
    %v483 = vld [vmem:[#allocation5 + $0x10] sm:$0xff]
    %v484 = vld [vmem:[#allocation5 + $0x18] sm:$0xff]
    %v485 = vadd.f32 %v481, %v239
    %v486 = vadd.f32 %v482, %v246
    %v487 = vadd.f32 %v483, %v253
    %v488 = vadd.f32 %v484, %v260
    %489 = vst.msk [vmem:[#allocation5] sm:$0xff] %vm116, %v485
    %490 = vst.msk [vmem:[#allocation5 + $0x8] sm:$0xff] %vm116, %v486
    %491 = vst.msk [vmem:[#allocation5 + $0x10] sm:$0xff] %vm116, %v487
    %492 = vst.msk [vmem:[#allocation5 + $0x18] sm:$0xff] %vm116, %v488
    // Predicated region
    $region22: #{tpu_custom_call.1} parent=1 // pred_check
      %p493 = pneg %p63
    $region23: #{tpu_custom_call.1} parent=1 // pred_check_branch
      %495 = sbr.rel (%p493) target = $region25
    $region24: #{tpu_custom_call.1} parent=1 // pred_region
      %v496 = vld [vmem:[#allocation2] sm:$0xff]
      %v497 = vld [vmem:[#allocation2 + $0x8] sm:$0xff]
      %v498 = vld [vmem:[#allocation2 + $0x10] sm:$0xff]
      %v499 = vld [vmem:[#allocation2 + $0x18] sm:$0xff]
      %v500 = vsel %vm116, %v496, 0.0
      %501 = vadd.xlane.f32.xlu0 %v500
      %v502 = vpop.xlane.xlu0 %501
      %v503 = vsel %vm116, %v497, 0.0
      %504 = vadd.xlane.f32.xlu0 %v503
      %v505 = vpop.xlane.xlu0 %504
      %v506 = vsel %vm116, %v498, 0.0
      %507 = vadd.xlane.f32.xlu0 %v506
      %v508 = vpop.xlane.xlu0 %507
      %v509 = vsel %vm116, %v499, 0.0
      %510 = vadd.xlane.f32.xlu0 %v509
      %v511 = vpop.xlane.xlu0 %510
      %v512 = vadd.f32 %v502, %v505
      %v513 = vrot.slane %v512, 4
      %v514 = vadd.f32 %v512, %v513
      %v515 = vrot.slane %v514, 2
      %v516 = vadd.f32 %v514, %v515
      %v517 = vrot.slane %v516, 1
      %v518 = vadd.f32 %v516, %v517
      %v519 = vadd.f32 %v508, %v511
      %v520 = vrot.slane %v519, 4
      %v521 = vadd.f32 %v519, %v520
      %v522 = vrot.slane %v521, 2
      %v523 = vadd.f32 %v521, %v522
      %v524 = vrot.slane %v523, 1
      %v525 = vadd.f32 %v523, %v524
      %vm526 = vcmask 0
      %527 = vst.msk [vmem:[%s2] sm:$0x1] %vm526, %v518
      %528 = vst.msk [vmem:[%s2 + $0x1] sm:$0x1] %vm526, %v525
      %v529 = vld [vmem:[#allocation3] sm:$0xff]
      %v530 = vld [vmem:[#allocation3 + $0x8] sm:$0xff]
      %v531 = vld [vmem:[#allocation3 + $0x10] sm:$0xff]
      %v532 = vld [vmem:[#allocation3 + $0x18] sm:$0xff]
      %v533 = vsel %vm116, %v529, 0.0
      %534 = vadd.xlane.f32.xlu0 %v533
      %v535 = vpop.xlane.xlu0 %534
      %v536 = vsel %vm116, %v530, 0.0
      %537 = vadd.xlane.f32.xlu0 %v536
      %v538 = vpop.xlane.xlu0 %537
      %v539 = vsel %vm116, %v531, 0.0
      %540 = vadd.xlane.f32.xlu0 %v539
      %v541 = vpop.xlane.xlu0 %540
      %v542 = vsel %vm116, %v532, 0.0
      %543 = vadd.xlane.f32.xlu0 %v542
      %v544 = vpop.xlane.xlu0 %543
      %v545 = vadd.f32 %v535, %v538
      %v546 = vrot.slane %v545, 4
      %v547 = vadd.f32 %v545, %v546
      %v548 = vrot.slane %v547, 2
      %v549 = vadd.f32 %v547, %v548
      %v550 = vrot.slane %v549, 1
      %v551 = vadd.f32 %v549, %v550
      %v552 = vadd.f32 %v541, %v544
      %v553 = vrot.slane %v552, 4
      %v554 = vadd.f32 %v552, %v553
      %v555 = vrot.slane %v554, 2
      %v556 = vadd.f32 %v554, %v555
      %v557 = vrot.slane %v556, 1
      %v558 = vadd.f32 %v556, %v557
      %559 = vst.msk [vmem:[%s3] sm:$0x1] %vm526, %v551
      %560 = vst.msk [vmem:[%s3 + $0x1] sm:$0x1] %vm526, %v558
      %v561 = vld [vmem:[#allocation4] sm:$0xff]
      %v562 = vld [vmem:[#allocation4 + $0x8] sm:$0xff]
      %v563 = vld [vmem:[#allocation4 + $0x10] sm:$0xff]
      %v564 = vld [vmem:[#allocation4 + $0x18] sm:$0xff]
      %v565 = vsel %vm116, %v561, 0.0
      %566 = vadd.xlane.f32.xlu0 %v565
      %v567 = vpop.xlane.xlu0 %566
      %v568 = vsel %vm116, %v562, 0.0
      %569 = vadd.xlane.f32.xlu0 %v568
      %v570 = vpop.xlane.xlu0 %569
      %v571 = vsel %vm116, %v563, 0.0
      %572 = vadd.xlane.f32.xlu0 %v571
      %v573 = vpop.xlane.xlu0 %572
      %v574 = vsel %vm116, %v564, 0.0
      %575 = vadd.xlane.f32.xlu0 %v574
      %v576 = vpop.xlane.xlu0 %575
      %v577 = vadd.f32 %v567, %v570
      %v578 = vrot.slane %v577, 4
      %v579 = vadd.f32 %v577, %v578
      %v580 = vrot.slane %v579, 2
      %v581 = vadd.f32 %v579, %v580
      %v582 = vrot.slane %v581, 1
      %v583 = vadd.f32 %v581, %v582
      %v584 = vadd.f32 %v573, %v576
      %v585 = vrot.slane %v584, 4
      %v586 = vadd.f32 %v584, %v585
      %v587 = vrot.slane %v586, 2
      %v588 = vadd.f32 %v586, %v587
      %v589 = vrot.slane %v588, 1
      %v590 = vadd.f32 %v588, %v589
      %591 = vst.msk [vmem:[%s4] sm:$0x1] %vm526, %v583
      %592 = vst.msk [vmem:[%s4 + $0x1] sm:$0x1] %vm526, %v590
      %v593 = vld [vmem:[#allocation5] sm:$0xff]
      %v594 = vld [vmem:[#allocation5 + $0x8] sm:$0xff]
      %v595 = vld [vmem:[#allocation5 + $0x10] sm:$0xff]
      %v596 = vld [vmem:[#allocation5 + $0x18] sm:$0xff]
      %v597 = vsel %vm116, %v593, 0.0
      %598 = vadd.xlane.f32.xlu0 %v597
      %v599 = vpop.xlane.xlu0 %598
      %v600 = vsel %vm116, %v594, 0.0
      %601 = vadd.xlane.f32.xlu0 %v600
      %v602 = vpop.xlane.xlu0 %601
      %v603 = vsel %vm116, %v595, 0.0
      %604 = vadd.xlane.f32.xlu0 %v603
      %v605 = vpop.xlane.xlu0 %604
      %v606 = vsel %vm116, %v596, 0.0
      %607 = vadd.xlane.f32.xlu0 %v606
      %v608 = vpop.xlane.xlu0 %607
      %v609 = vadd.f32 %v599, %v602
      %v610 = vrot.slane %v609, 4
      %v611 = vadd.f32 %v609, %v610
      %v612 = vrot.slane %v611, 2
      %v613 = vadd.f32 %v611, %v612
      %v614 = vrot.slane %v613, 1
      %v615 = vadd.f32 %v613, %v614
      %v616 = vadd.f32 %v605, %v608
      %v617 = vrot.slane %v616, 4
      %v618 = vadd.f32 %v616, %v617
      %v619 = vrot.slane %v618, 2
      %v620 = vadd.f32 %v618, %v619
      %v621 = vrot.slane %v620, 1
      %v622 = vadd.f32 %v620, %v621
      %623 = vst.msk [vmem:[%s5] sm:$0x1] %vm526, %v615
      %624 = vst.msk [vmem:[%s5 + $0x1] sm:$0x1] %vm526, %v622
    $region25: #{tpu_custom_call.1} parent=1 // pred_fallthru
      _
    // Predicated region
    $region26: #{tpu_custom_call.1} parent=1 // pred_check
      _
    $region27: #{tpu_custom_call.1} parent=1 // pred_check_branch
      %626 = sbr.rel (0) target = $region29
    $region28: #{tpu_custom_call.1} parent=1 // pred_region
      _
    $region29: #{tpu_custom_call.1} parent=1 // pred_fallthru
      _
    // Predicated region
    $region30: #{tpu_custom_call.1} parent=1 // pred_check
      _
    $region31: #{tpu_custom_call.1} parent=1 // pred_check_branch
      %628 = sbr.rel (0) target = $region33
    $region32: #{tpu_custom_call.1} parent=1 // pred_region
      _
    $region33: #{tpu_custom_call.1} parent=1 // pred_fallthru
      _
    // Predicated region
    $region34: #{tpu_custom_call.1} parent=1 // pred_check
      _
    $region35: #{tpu_custom_call.1} parent=1 // pred_check_branch
      %630 = sbr.rel (0) target = $region37
    $region36: #{tpu_custom_call.1} parent=1 // pred_region
      _
    $region37: #{tpu_custom_call.1} parent=1 // pred_fallthru
      _
    // Predicated region
    $region38: #{tpu_custom_call.1} parent=1 // pred_check
      _
    $region39: #{tpu_custom_call.1} parent=1 // pred_check_branch
      %632 = sbr.rel (0) target = $region41
    $region40: #{tpu_custom_call.1} parent=1 // pred_region
      _
    $region41: #{tpu_custom_call.1} parent=1 // pred_fallthru
      _
    // Predicated region
    $region42: #{tpu_custom_call.1} parent=1 // pred_check
      _
    $region43: #{tpu_custom_call.1} parent=1 // pred_check_branch
      %634 = sbr.rel (0) target = $region45
    $region44: #{tpu_custom_call.1} parent=1 // pred_region
      _
    $region45: #{tpu_custom_call.1} parent=1 // pred_fallthru
      _
    // Predicated region
    $region46: #{tpu_custom_call.1} parent=1 // pred_check
      _
    $region47: #{tpu_custom_call.1} parent=1 // pred_check_branch
      %636 = sbr.rel (0) target = $region49
    $region48: #{tpu_custom_call.1} parent=1 // pred_region
      _
    $region49: #{tpu_custom_call.1} parent=1 // pred_fallthru
      _
    // Predicated region
    $region50: #{tpu_custom_call.1} parent=1 // pred_check
      _
    $region51: #{tpu_custom_call.1} parent=1 // pred_check_branch
      %638 = sbr.rel (0) target = $region53
    $region52: #{tpu_custom_call.1} parent=1 // pred_region
      _
    $region53: #{tpu_custom_call.1} parent=1 // pred_fallthru
      _
    // Predicated region
    $region54: #{tpu_custom_call.1} parent=1 // pred_check
      _
    $region55: #{tpu_custom_call.1} parent=1 // pred_check_branch
      %640 = sbr.rel (0) target = $region57
    $region56: #{tpu_custom_call.1} parent=1 // pred_region
      _
    $region57: #{tpu_custom_call.1} parent=1 // pred_fallthru
      _
    %641 = vsyncpa [#allocation7], 1
    %642 = vsyncpa [#allocation9], 1

</llo_original>
